<compile_context>
chip_gen: v5e
topology: v5e:2x2
jax: 0.10.0
libtpu: 0.0.40
codegen_flags: <defaults>
</compile_context>

<pallas_src>
import jax
import jax.numpy as jnp
from jax.experimental import pallas as pl
from jax.experimental.pallas import tpu as pltpu

LANE = 128
HID1 = 64
HID2 = 32
NEG_INF = -1e30  # bakes the "padded logit" mask into b3


def _round_up(n, m):
    return ((n + m - 1) // m) * m


def _sub_action_head_kernel(x_ref, w1_ref, b1_ref, w2_ref, b2_ref, w3_ref, b3_ref, o_ref):
    wdt = w1_ref.dtype
    # fc1 + relu: K = real input width, N padded to 128 (zero w/b cols -> relu(0)=0, exact).
    h1 = jnp.maximum(
        jnp.dot(x_ref[...], w1_ref[...], preferred_element_type=jnp.float32) + b1_ref[...], 0.0)
    # fc2 + relu: contract only the real K=64 hidden columns.
    h2 = jnp.maximum(
        jnp.dot(h1[:, :HID1].astype(wdt), w2_ref[...], preferred_element_type=jnp.float32)
        + b2_ref[...], 0.0)
    # out: contract real K=32; padded logits carry b3 = -1e30 -> exp == 0, so the
    # 128-lane softmax is numerically identical to the unpadded one.
    logits = (jnp.dot(h2[:, :HID2].astype(wdt), w3_ref[...], preferred_element_type=jnp.float32)
              + b3_ref[...])
    m = jnp.max(logits, axis=-1, keepdims=True)
    e = jnp.exp(logits - m)
    probs = e * pl.reciprocal(jnp.sum(e, axis=-1, keepdims=True), approx=False)
    # Store only the real output_dim lanes (sub-128 masked vst; ~16x less writeback).
    o_ref[...] = probs[:, :o_ref.shape[-1]]


def sub_action_head_forward(x, params, output_dim, *, block_b=None):
    """x: [B, input_dim] -> [B, output_dim] f32 softmax probs."""
    w1, b1, w2, b2, w3, b3 = params  # w1:(in,128) w2:(64,128) w3:(32,128) bf16; b*: (1,128) f32
    B, in_dim = x.shape
    assert w1.shape[0] == in_dim

    if x.dtype != w1.dtype:
        # Fallback only: in a real pipeline store x in bf16 upstream so this extra pass vanishes.
        x = x.astype(w1.dtype)

    if block_b is None:
        if B >= 2048:
            block_b = 1024                            # big tiles amortize per-step overhead
        elif B >= 64:
            block_b = _round_up(pl.cdiv(B, 2), 16)    # >=2 grid steps -> both v7x TCs get work
        else:
            block_b = B                               # tiny batch: one full-array block

    grid = (pl.cdiv(B, block_b),)
    const = lambda i: (0, 0)  # weights/biases: single VMEM-resident block for the whole grid

    out = pl.pallas_call(
        _sub_action_head_kernel,
        out_shape=jax.ShapeDtypeStruct((B, output_dim), jnp.float32),
        grid=grid,
        in_specs=[
            pl.BlockSpec((block_b, in_dim), lambda i: (i, 0)),  # x: tiled over batch, natural width
            pl.BlockSpec((in_dim, LANE), const),                # w1 (bf16)
            pl.BlockSpec((1, LANE), const),                     # b1 (f32)
            pl.BlockSpec((HID1, LANE), const),                  # w2 (bf16)
            pl.BlockSpec((1, LANE), const),                     # b2 (f32)
            pl.BlockSpec((HID2, LANE), const),                  # w3 (bf16)
            pl.BlockSpec((1, LANE), const),                     # b3 (f32, padded lanes = -1e30)
        ],
        out_specs=pl.BlockSpec((block_b, output_dim), lambda i: (i, 0)),
        compiler_params=pltpu.CompilerParams(dimension_semantics=("parallel",)),
    )(x, w1, b1, w2, b2, w3, b3)

    return out


def init_params(key, input_dim, output_dim, *, w_dtype=jnp.bfloat16):
    """PyTorch nn.Linear-style init (uniform +-1/sqrt(fan_in)).  K dims are stored at their
    real widths; only the N (output) dims are zero-padded to 128 lanes.  b3's padded lanes
    hold -1e30 so padded logits vanish in the softmax.  Weights bf16, biases f32."""

    def linear(k, fan_in, fan_out, pad_out, bias_pad_value=0.0):
        kw, kb = jax.random.split(k)
        bound = 1.0 / jnp.sqrt(jnp.float32(fan_in))
        w = jax.random.uniform(kw, (fan_in, fan_out), jnp.float32, -bound, bound)
        b = jax.random.uniform(kb, (fan_out,), jnp.float32, -bound, bound)
        wp = jnp.zeros((fan_in, pad_out), jnp.float32).at[:, :fan_out].set(w).astype(w_dtype)
        bp = jnp.full((1, pad_out), bias_pad_value, jnp.float32).at[0, :fan_out].set(b)
        return wp, bp

    k1, k2, k3 = jax.random.split(key, 3)
    w1, b1 = linear(k1, input_dim, HID1, LANE)
    w2, b2 = linear(k2, HID1, HID2, LANE)
    w3, b3 = linear(k3, HID2, output_dim, LANE, bias_pad_value=NEG_INF)
    return (w1, b1, w2, b2, w3, b3)


if __name__ == "__main__":
    key = jax.random.PRNGKey(0)
    kp, kx = jax.random.split(key)

    batch = 8
    input_dim = 32
    output_dim = 8

    params = init_params(kp, input_dim, output_dim)
    x_f32 = jax.random.normal(kx, (batch, input_dim), jnp.float32)
    x = x_f32.astype(jnp.bfloat16)  # activations stored bf16: halves the dominant HBM stream

    probs = jax.block_until_ready(sub_action_head_forward(x, params, output_dim))

    # Pure-JAX reference mirroring the kernel's bf16-operand / f32-accumulate math,
    # evaluated on the unpadded sub-blocks of the params.
    w1, b1, w2, b2, w3, b3 = params
    f32 = jnp.float32
    xr = x.astype(f32)
    h1 = jnp.maximum(xr @ w1.astype(f32)[:, :HID1] + b1[0, :HID1], 0.0)
    h2 = jnp.maximum(h1.astype(jnp.bfloat16).astype(f32) @ w2.astype(f32)[:, :HID2]
                     + b2[0, :HID2], 0.0)
    logits = (h2.astype(jnp.bfloat16).astype(f32) @ w3.astype(f32)[:, :output_dim]
              + b3[0, :output_dim])
    ref = jax.nn.softmax(logits, axis=-1)

    assert probs.shape == (batch, output_dim)
    assert jnp.allclose(jnp.sum(probs, axis=-1), 1.0, atol=1e-4)
    assert jnp.allclose(probs, ref, atol=2e-3), (probs, ref)

    print("KERNEL_OK")
</pallas_src>

<mosaic_0001>
module attributes {stable_mosaic.version = 11 : i64} {
  func.func @_sub_action_head_kernel(%arg0: i32, %arg1: memref<8x32xbf16, #tpu.memory_space<vmem>>, %arg2: memref<32x128xbf16, #tpu.memory_space<vmem>>, %arg3: memref<1x128xf32, #tpu.memory_space<vmem>>, %arg4: memref<64x128xbf16, #tpu.memory_space<vmem>>, %arg5: memref<1x128xf32, #tpu.memory_space<vmem>>, %arg6: memref<32x128xbf16, #tpu.memory_space<vmem>>, %arg7: memref<1x128xf32, #tpu.memory_space<vmem>>, %arg8: memref<8x8xf32, #tpu.memory_space<vmem>>) attributes {dimension_semantics = [#tpu.dimension_semantics<parallel>], iteration_bounds = array<i64: 1>, scalar_prefetch = 0 : i64, scratch_operands = 0 : i64, tpu.core_type = #tpu.core_type<tc>, window_params = [{transform_indices = @transform_0, window_bounds = array<i64: 8, 32>}, {pipeline_mode = #tpu.pipeline_mode<synchronous>, transform_indices = @transform_1, window_bounds = array<i64: 32, 128>}, {pipeline_mode = #tpu.pipeline_mode<synchronous>, transform_indices = @transform_2, window_bounds = array<i64: 1, 128>}, {pipeline_mode = #tpu.pipeline_mode<synchronous>, transform_indices = @transform_3, window_bounds = array<i64: 64, 128>}, {pipeline_mode = #tpu.pipeline_mode<synchronous>, transform_indices = @transform_4, window_bounds = array<i64: 1, 128>}, {pipeline_mode = #tpu.pipeline_mode<synchronous>, transform_indices = @transform_5, window_bounds = array<i64: 32, 128>}, {pipeline_mode = #tpu.pipeline_mode<synchronous>, transform_indices = @transform_6, window_bounds = array<i64: 1, 128>}, {transform_indices = @transform_7, window_bounds = array<i64: 8, 8>}]} {
    %c0 = arith.constant 0 : index
    %c0_0 = arith.constant 0 : index
    %0 = vector.load %arg1[%c0, %c0_0] : memref<8x32xbf16, #tpu.memory_space<vmem>>, vector<8x32xbf16>
    %c0_1 = arith.constant 0 : index
    %c0_2 = arith.constant 0 : index
    %1 = vector.load %arg2[%c0_1, %c0_2] : memref<32x128xbf16, #tpu.memory_space<vmem>>, vector<32x128xbf16>
    %cst = arith.constant dense<0.000000e+00> : vector<8x128xf32>
    %2 = tpu.matmul %0, %1, %cst {dimension_numbers = #tpu.dot_dimension_numbers<[1], [0], [0], [1], [0, 0, 1, 1], [], []>} : vector<8x32xbf16>, vector<32x128xbf16>, vector<8x128xf32> -> vector<8x128xf32>
    %c0_3 = arith.constant 0 : index
    %c0_4 = arith.constant 0 : index
    %3 = vector.load %arg3[%c0_3, %c0_4] : memref<1x128xf32, #tpu.memory_space<vmem>>, vector<1x128xf32>
    %4 = vector.broadcast %3 : vector<1x128xf32> to vector<8x128xf32>
    %5 = arith.addf %2, %4 : vector<8x128xf32>
    %cst_5 = arith.constant 0.000000e+00 : f32
    %6 = vector.broadcast %cst_5 : f32 to vector<8x128xf32>
    %7 = arith.maximumf %5, %6 : vector<8x128xf32>
    %8 = vector.extract_strided_slice %7 {offsets = [0, 0], sizes = [8, 64], strides = [1, 1]} : vector<8x128xf32> to vector<8x64xf32>
    %9 = arith.truncf %8 : vector<8x64xf32> to vector<8x64xbf16>
    %c0_6 = arith.constant 0 : index
    %c0_7 = arith.constant 0 : index
    %10 = vector.load %arg4[%c0_6, %c0_7] : memref<64x128xbf16, #tpu.memory_space<vmem>>, vector<64x128xbf16>
    %cst_8 = arith.constant dense<0.000000e+00> : vector<8x128xf32>
    %11 = tpu.matmul %9, %10, %cst_8 {dimension_numbers = #tpu.dot_dimension_numbers<[1], [0], [0], [1], [0, 0, 1, 1], [], []>} : vector<8x64xbf16>, vector<64x128xbf16>, vector<8x128xf32> -> vector<8x128xf32>
    %c0_9 = arith.constant 0 : index
    %c0_10 = arith.constant 0 : index
    %12 = vector.load %arg5[%c0_9, %c0_10] : memref<1x128xf32, #tpu.memory_space<vmem>>, vector<1x128xf32>
    %13 = vector.broadcast %12 : vector<1x128xf32> to vector<8x128xf32>
    %14 = arith.addf %11, %13 : vector<8x128xf32>
    %cst_11 = arith.constant 0.000000e+00 : f32
    %15 = vector.broadcast %cst_11 : f32 to vector<8x128xf32>
    %16 = arith.maximumf %14, %15 : vector<8x128xf32>
    %17 = vector.extract_strided_slice %16 {offsets = [0, 0], sizes = [8, 32], strides = [1, 1]} : vector<8x128xf32> to vector<8x32xf32>
    %18 = arith.truncf %17 : vector<8x32xf32> to vector<8x32xbf16>
    %c0_12 = arith.constant 0 : index
    %c0_13 = arith.constant 0 : index
    %19 = vector.load %arg6[%c0_12, %c0_13] : memref<32x128xbf16, #tpu.memory_space<vmem>>, vector<32x128xbf16>
    %cst_14 = arith.constant dense<0.000000e+00> : vector<8x128xf32>
    %20 = tpu.matmul %18, %19, %cst_14 {dimension_numbers = #tpu.dot_dimension_numbers<[1], [0], [0], [1], [0, 0, 1, 1], [], []>} : vector<8x32xbf16>, vector<32x128xbf16>, vector<8x128xf32> -> vector<8x128xf32>
    %c0_15 = arith.constant 0 : index
    %c0_16 = arith.constant 0 : index
    %21 = vector.load %arg7[%c0_15, %c0_16] : memref<1x128xf32, #tpu.memory_space<vmem>>, vector<1x128xf32>
    %22 = vector.broadcast %21 : vector<1x128xf32> to vector<8x128xf32>
    %23 = arith.addf %20, %22 : vector<8x128xf32>
    %cst_17 = arith.constant dense<0xFF800000> : vector<8xf32>
    %24 = vector.multi_reduction <maximumf>, %23, %cst_17 [1] : vector<8x128xf32> to vector<8xf32>
    %25 = vector.shape_cast %24 : vector<8xf32> to vector<8x1xf32>
    %26 = vector.broadcast %25 : vector<8x1xf32> to vector<8x128xf32>
    %27 = arith.subf %23, %26 : vector<8x128xf32>
    %28 = math.exp %27 : vector<8x128xf32>
    %cst_18 = arith.constant dense<0.000000e+00> : vector<8xf32>
    %29 = vector.multi_reduction <add>, %28, %cst_18 [1] : vector<8x128xf32> to vector<8xf32>
    %30 = vector.shape_cast %29 : vector<8xf32> to vector<8x1xf32>
    %31 = tpu.reciprocal %30 : vector<8x1xf32> -> vector<8x1xf32>
    %32 = vector.broadcast %31 : vector<8x1xf32> to vector<8x128xf32>
    %33 = arith.mulf %28, %32 : vector<8x128xf32>
    %34 = vector.extract_strided_slice %33 {offsets = [0, 0], sizes = [8, 8], strides = [1, 1]} : vector<8x128xf32> to vector<8x8xf32>
    %c0_19 = arith.constant 0 : index
    %c0_20 = arith.constant 0 : index
    %35 = vector.load %arg8[%c0_19, %c0_20] : memref<8x8xf32, #tpu.memory_space<vmem>>, vector<8x8xf32>
    tpu.vector_store %arg8[%c0_19, %c0_20], %34 {strides = array<i32>} : memref<8x8xf32, #tpu.memory_space<vmem>>, vector<8x8xf32>,
    return
  }
  func.func @transform_0(%arg0: i32) -> (i32, i32) {
    %c0_i32 = arith.constant 0 : i32
    %c0_i32_0 = arith.constant 0 : i32
    return %arg0, %c0_i32 : i32, i32
  }
  func.func @transform_1(%arg0: i32) -> (i32, i32) {
    %c0_i32 = arith.constant 0 : i32
    %c0_i32_0 = arith.constant 0 : i32
    %c0_i32_1 = arith.constant 0 : i32
    return %c0_i32, %c0_i32_0 : i32, i32
  }
  func.func @transform_2(%arg0: i32) -> (i32, i32) {
    %c0_i32 = arith.constant 0 : i32
    %c0_i32_0 = arith.constant 0 : i32
    %c0_i32_1 = arith.constant 0 : i32
    return %c0_i32, %c0_i32_0 : i32, i32
  }
  func.func @transform_3(%arg0: i32) -> (i32, i32) {
    %c0_i32 = arith.constant 0 : i32
    %c0_i32_0 = arith.constant 0 : i32
    %c0_i32_1 = arith.constant 0 : i32
    return %c0_i32, %c0_i32_0 : i32, i32
  }
  func.func @transform_4(%arg0: i32) -> (i32, i32) {
    %c0_i32 = arith.constant 0 : i32
    %c0_i32_0 = arith.constant 0 : i32
    %c0_i32_1 = arith.constant 0 : i32
    return %c0_i32, %c0_i32_0 : i32, i32
  }
  func.func @transform_5(%arg0: i32) -> (i32, i32) {
    %c0_i32 = arith.constant 0 : i32
    %c0_i32_0 = arith.constant 0 : i32
    %c0_i32_1 = arith.constant 0 : i32
    return %c0_i32, %c0_i32_0 : i32, i32
  }
  func.func @transform_6(%arg0: i32) -> (i32, i32) {
    %c0_i32 = arith.constant 0 : i32
    %c0_i32_0 = arith.constant 0 : i32
    %c0_i32_1 = arith.constant 0 : i32
    return %c0_i32, %c0_i32_0 : i32, i32
  }
  func.func @transform_7(%arg0: i32) -> (i32, i32) {
    %c0_i32 = arith.constant 0 : i32
    %c0_i32_0 = arith.constant 0 : i32
    return %arg0, %c0_i32 : i32, i32
  }
}

</mosaic_0001>

<llo_original>
// kernel: tpu_custom_call.1
$region0: #{tpu_custom_call.1}
  #allocation0 [shape = 'u32[]', space=smem, size = 0x4, offset = 0x4, fixed_abs, tag = 'smem constant byte address 0x4 - core index']
  #allocation1 [shape = 'u32[72,128]{1,0:T(1,128)}', space=vmem, size = 0x9000, scoped, tag = 'internal scratch']
  %s0 = inlined_call_operand.hbm [shape: bf16[8,32], index: 0, kind: input, shape index: {}]
  %s1 = inlined_call_operand.hbm [shape: bf16[32,128], index: 1, kind: input, shape index: {}]
  %s2 = inlined_call_operand.vmem [shape: f32[1,128], index: 2, kind: input, shape index: {}]
  %s3 = inlined_call_operand.hbm [shape: bf16[64,128], index: 3, kind: input, shape index: {}]
  %s4 = inlined_call_operand.vmem [shape: f32[1,128], index: 4, kind: input, shape index: {}]
  %s5 = inlined_call_operand.hbm [shape: bf16[32,128], index: 5, kind: input, shape index: {}]
  %s6 = inlined_call_operand.vmem [shape: f32[1,128], index: 6, kind: input, shape index: {}]
  %s7 = inlined_call_operand.hbm [shape: f32[8,8], index: 7, kind: output, shape index: {}]
  %s8 = sld [smem:[#allocation0]]
  $region54: #{tpu_custom_call.1} parent=0
    _
  %s10 = ssub.s32 1, %s8
  %s11 = scalar_select 0, %s10, %s8
  $region1: #{tpu_custom_call.1} parent=0
    #allocation2 [shape = 'u8[2048]{0}', space=vmem, size = 0x800, scoped, tag = 'input window, operand 0, single buffered']
    #allocation3 [shape = 's32[1]{0}', space=sflag, size = 0x4, scoped, tag = 'scoped memory for tpu_custom_call.1']
    #allocation4 [shape = 's32[1]{0}', space=sflag, size = 0x4, scoped, tag = 'scoped memory for tpu_custom_call.1']
    #allocation5 [shape = 'u8[8192]{0}', space=vmem, size = 0x2000, scoped, tag = 'input window, operand 1, single buffered']
    #allocation6 [shape = 's32[1]{0}', space=sflag, size = 0x4, scoped, tag = 'scoped memory for tpu_custom_call.1']
    #allocation7 [shape = 'u8[16384]{0}', space=vmem, size = 0x4000, scoped, tag = 'input window, operand 3, single buffered']
    #allocation8 [shape = 'u8[8192]{0}', space=vmem, size = 0x2000, scoped, tag = 'input window, operand 5, single buffered']
    #allocation9 [shape = 's32[1]{0}', space=sflag, size = 0x4, scoped, tag = 'scoped memory for tpu_custom_call.1']
    #allocation10 [shape = 'u8[4096]{0}', space=vmem, size = 0x1000, scoped, tag = 'output window, operand 0, single buffered']
    %12 = vsyncpa [#allocation3], 0
    %13 = vsyncpa [#allocation6], 0
    %14 = vsyncpa [#allocation9], 0
    %15 = vsyncpa [#allocation4], 0
    // Predicated region
    $region2: #{tpu_custom_call.1} parent=1 // pred_check
      _
    $region3: #{tpu_custom_call.1} parent=1 // pred_check_branch
      %17 = sbr.rel (0) target = $region5
    $region4: #{tpu_custom_call.1} parent=1 // pred_region
      %19 = vsyncadd [#allocation3], 0
      %s21 = sshll.u32 %s0, 4
      %s22 = int_to_ptr.hbm [resolvable:$true] %s21
      %s23 = sshll.u32 [#allocation2], 4
      %s24 = int_to_ptr.vmem [resolvable:$true] %s23
      %26 = dma.hbm_to_vmem [thread:$0]  %s22, 64, %s24, [#allocation3]
    $region5: #{tpu_custom_call.1} parent=1 // pred_fallthru
      _
    // Predicated region
    $region6: #{tpu_custom_call.1} parent=1 // pred_check
      _
    $region7: #{tpu_custom_call.1} parent=1 // pred_check_branch
      %28 = sbr.rel (0) target = $region9
    $region8: #{tpu_custom_call.1} parent=1 // pred_region
      %30 = vsyncadd [#allocation6], 0
      %s31 = sshll.u32 %s1, 4
      %s32 = int_to_ptr.hbm [resolvable:$true] %s31
      %s33 = sshll.u32 [#allocation5], 4
      %s34 = int_to_ptr.vmem [resolvable:$true] %s33
      %39 = dma.hbm_to_vmem [thread:$0]  %s32, 256, %s34, [#allocation6], 64, 64, 4
    $region9: #{tpu_custom_call.1} parent=1 // pred_fallthru
      _
    // Predicated region
    $region10: #{tpu_custom_call.1} parent=1 // pred_check
      _
    $region11: #{tpu_custom_call.1} parent=1 // pred_check_branch
      %41 = sbr.rel (0) target = $region13
    $region12: #{tpu_custom_call.1} parent=1 // pred_region
      _
    $region13: #{tpu_custom_call.1} parent=1 // pred_fallthru
      _
    // Predicated region
    $region14: #{tpu_custom_call.1} parent=1 // pred_check
      _
    $region15: #{tpu_custom_call.1} parent=1 // pred_check_branch
      %43 = sbr.rel (0) target = $region17
    $region16: #{tpu_custom_call.1} parent=1 // pred_region
      %45 = vsyncadd [#allocation6], 0
      %s46 = sshll.u32 %s3, 4
      %s47 = int_to_ptr.hbm [resolvable:$true] %s46
      %s48 = sshll.u32 [#allocation7], 4
      %s49 = int_to_ptr.vmem [resolvable:$true] %s48
      %54 = dma.hbm_to_vmem [thread:$0]  %s47, 512, %s49, [#allocation6], 64, 64, 4
    $region17: #{tpu_custom_call.1} parent=1 // pred_fallthru
      _
    // Predicated region
    $region18: #{tpu_custom_call.1} parent=1 // pred_check
      _
    $region19: #{tpu_custom_call.1} parent=1 // pred_check_branch
      %56 = sbr.rel (0) target = $region21
    $region20: #{tpu_custom_call.1} parent=1 // pred_region
      _
    $region21: #{tpu_custom_call.1} parent=1 // pred_fallthru
      _
    // Predicated region
    $region22: #{tpu_custom_call.1} parent=1 // pred_check
      _
    $region23: #{tpu_custom_call.1} parent=1 // pred_check_branch
      %58 = sbr.rel (0) target = $region25
    $region24: #{tpu_custom_call.1} parent=1 // pred_region
      %60 = vsyncadd [#allocation9], 0
      %s61 = sshll.u32 %s5, 4
      %s62 = int_to_ptr.hbm [resolvable:$true] %s61
      %s63 = sshll.u32 [#allocation8], 4
      %s64 = int_to_ptr.vmem [resolvable:$true] %s63
      %69 = dma.hbm_to_vmem [thread:$0]  %s62, 256, %s64, [#allocation9], 64, 64, 4
    $region25: #{tpu_custom_call.1} parent=1 // pred_fallthru
      _
    // Predicated region
    $region26: #{tpu_custom_call.1} parent=1 // pred_check
      _
    $region27: #{tpu_custom_call.1} parent=1 // pred_check_branch
      %71 = sbr.rel (0) target = $region29
    $region28: #{tpu_custom_call.1} parent=1 // pred_region
      _
    $region29: #{tpu_custom_call.1} parent=1 // pred_fallthru
      _
    // Predicated region
    $region30: #{tpu_custom_call.1} parent=1 // pred_check
      _
    $region31: #{tpu_custom_call.1} parent=1 // pred_check_branch
      %73 = sbr.rel (0) target = $region33
    $region32: #{tpu_custom_call.1} parent=1 // pred_region
      %75 = dma.done [#allocation3], 64
    $region33: #{tpu_custom_call.1} parent=1 // pred_fallthru
      _
    // Predicated region
    $region34: #{tpu_custom_call.1} parent=1 // pred_check
      _
    $region35: #{tpu_custom_call.1} parent=1 // pred_check_branch
      %77 = sbr.rel (0) target = $region37
    $region36: #{tpu_custom_call.1} parent=1 // pred_region
      %79 = dma.done [#allocation6], 256
    $region37: #{tpu_custom_call.1} parent=1 // pred_fallthru
      _
    // Predicated region
    $region38: #{tpu_custom_call.1} parent=1 // pred_check
      _
    $region39: #{tpu_custom_call.1} parent=1 // pred_check_branch
      %81 = sbr.rel (0) target = $region41
    $region40: #{tpu_custom_call.1} parent=1 // pred_region
      %83 = dma.done [#allocation6], 512
    $region41: #{tpu_custom_call.1} parent=1 // pred_fallthru
      _
    // Predicated region
    $region42: #{tpu_custom_call.1} parent=1 // pred_check
      _
    $region43: #{tpu_custom_call.1} parent=1 // pred_check_branch
      %85 = sbr.rel (0) target = $region45
    $region44: #{tpu_custom_call.1} parent=1 // pred_region
      %87 = dma.done [#allocation9], 256
    $region45: #{tpu_custom_call.1} parent=1 // pred_fallthru
      _
    %v89 = vld [vmem:[#allocation2] sm:$0xf]
    %v90 = vld [vmem:[#allocation5] sm:$0xf]
    %v91 = vld [vmem:[#allocation5 + $0x4] sm:$0xf]
    %v92 = vld [vmem:[#allocation5 + $0x8] sm:$0xf]
    %v93 = vld [vmem:[#allocation5 + $0xc] sm:$0xf]
    %v94 = vld [vmem:[%s2] sm:$0x1]
    %v96 = vperm.slane %v94, 0
    %v102 = vunpack.c.l.b16 %v90
    %v103 = vunpack.c.l.b16 %v91
    %v104 = vunpack.c.l.b16 %v92
    %v105 = vunpack.c.l.b16 %v93
    %v106 = vpack.c.b16 %v103, %v102
    %v107 = vpack.c.b16 %v105, %v104
    %vm110 = vcmask 261120
    %v112 = vsel %vm110, %v89, 0
    %114 = vmatpush.bf16.msra.mxu0 0
    %115 = vmatpush.bf16.msra.mxu0 0
    %116 = vmatpush.bf16.msra.mxu0 0
    %117 = vmatpush.bf16.msra.mxu0 0
    %118 = vmatpush.bf16.msra.mxu0 0
    %119 = vmatpush.bf16.msra.mxu0 0
    %120 = vmatpush.bf16.msra.mxu0 %v107
    %121 = vmatpush.bf16.msra.mxu0 %v106
    %122 = vmatmul.bf16.gmra.mxu0 %v112
    %v123 = vpop.f32.mrf.mxu0
    %v124 = vadd.f32 %v96, %v123
    %v125 = vpop.f32.mrf.mxu0
    %126 = vdwg.mxu0
    %v127 = vmax.f32 %v124, 0.0
    %v128 = vpack.c.bf16 %v127, %v127
    %v129 = vld [vmem:[#allocation7] sm:$0xf]
    %v130 = vld [vmem:[#allocation7 + $0x4] sm:$0xf]
    %v131 = vld [vmem:[#allocation7 + $0x8] sm:$0xf]
    %v132 = vld [vmem:[#allocation7 + $0xc] sm:$0xf]
    %v133 = vld [vmem:[#allocation7 + $0x10] sm:$0xf]
    %v134 = vld [vmem:[#allocation7 + $0x14] sm:$0xf]
    %v135 = vld [vmem:[#allocation7 + $0x18] sm:$0xf]
    %v136 = vld [vmem:[#allocation7 + $0x1c] sm:$0xf]
    %v137 = vld [vmem:[%s4] sm:$0x1]
    %v139 = vperm.slane %v137, 0
    %v149 = vunpack.c.l.b16 %v129
    %v150 = vunpack.c.l.b16 %v130
    %v151 = vunpack.c.l.b16 %v131
    %v152 = vunpack.c.l.b16 %v132
    %v153 = vunpack.c.l.b16 %v133
    %v154 = vunpack.c.l.b16 %v134
    %v155 = vunpack.c.l.b16 %v135
    %v156 = vunpack.c.l.b16 %v136
    %v157 = vpack.c.b16 %v150, %v149
    %v158 = vpack.c.b16 %v152, %v151
    %v159 = vpack.c.b16 %v154, %v153
    %v160 = vpack.c.b16 %v156, %v155
    %vm165 = vcmask 523264
    %v167 = vsel %vm165, %v128, 0
    %169 = vmatpush.bf16.msra.mxu0 0
    %170 = vmatpush.bf16.msra.mxu0 0
    %171 = vmatpush.bf16.msra.mxu0 0
    %172 = vmatpush.bf16.msra.mxu0 0
    %173 = vmatpush.bf16.msra.mxu0 %v160
    %174 = vmatpush.bf16.msra.mxu0 %v159
    %175 = vmatpush.bf16.msra.mxu0 %v158
    %176 = vmatpush.bf16.msra.mxu0 %v157
    %177 = vmatmul.bf16.gmra.mxu0 %v167
    %v178 = vpop.f32.mrf.mxu0
    %v179 = vadd.f32 %v139, %v178
    %v180 = vpop.f32.mrf.mxu0
    %181 = vdwg.mxu0
    %v182 = vmax.f32 %v179, 0.0
    %v183 = vpack.c.bf16 %v182, %v182
    %v184 = vld [vmem:[#allocation8] sm:$0xf]
    %v185 = vld [vmem:[#allocation8 + $0x4] sm:$0xf]
    %v186 = vld [vmem:[#allocation8 + $0x8] sm:$0xf]
    %v187 = vld [vmem:[#allocation8 + $0xc] sm:$0xf]
    %v188 = vld [vmem:[%s6] sm:$0x1]
    %v190 = vperm.slane %v188, 0
    %v196 = vunpack.c.l.b16 %v184
    %v197 = vunpack.c.l.b16 %v185
    %v198 = vunpack.c.l.b16 %v186
    %v199 = vunpack.c.l.b16 %v187
    %v200 = vpack.c.b16 %v197, %v196
    %v201 = vpack.c.b16 %v199, %v198
    %v205 = vsel %vm110, %v183, 0
    %207 = vmatpush.bf16.msra.mxu0 0
    %208 = vmatpush.bf16.msra.mxu0 0
    %209 = vmatpush.bf16.msra.mxu0 0
    %210 = vmatpush.bf16.msra.mxu0 0
    %211 = vmatpush.bf16.msra.mxu0 0
    %212 = vmatpush.bf16.msra.mxu0 0
    %213 = vmatpush.bf16.msra.mxu0 %v201
    %214 = vmatpush.bf16.msra.mxu0 %v200
    %215 = vmatmul.bf16.gmra.mxu0 %v205
    %v216 = vpop.f32.mrf.mxu0
    %v217 = vadd.f32 %v190, %v216
    %v218 = vpop.f32.mrf.mxu0
    %219 = vdwg.mxu0
    %220 = vmax.xlane.f32.xlu0 %v217
    %v221 = vpop.xlane.xlu0 %220
    %v222 = vsub.f32 %v217, %v221
    %v223 = vmul.f32 %v222, 1.442695
    %v224 = vpow.pop %v223
    %225 = vadd.xlane.f32.xlu0 %v224
    %v226 = vpop.xlane.xlu0 %225
    %v227 = vrcp.pop %v226
    %v228 = vmul.f32 %v226, %v227
    %v229 = vsub.f32 1.0, %v228
    %v230 = vmul.f32 %v227, %v229
    %v231 = vadd.f32 %v227, %v230
    %vm232 = vweird.f32 %v226
    %vm233 = vweird.f32 %v227
    %vm234 = vmor %vm232, %vm233
    %v235 = vsel %vm234, %v227, %v231
    %v236 = vand.u32 2147483647, %v226
    %vm237 = vcmp.eq.f32.partialorder %v236, 8.507059e+37
    %v238 = vand.u32 %v226, 2147483648
    %v239 = vor.u32 1.1754944e-38, %v238
    %v240 = vsel %vm237, %v239, %v235
    %v241 = vmul.f32 %v224, %v240
    %vm242 = vcmask 64512
    %243 = vst.msk [vmem:[#allocation10] sm:$0xff] %vm242, %v241
    // Predicated region
    $region46: #{tpu_custom_call.1} parent=1 // pred_check
      _
    $region47: #{tpu_custom_call.1} parent=1 // pred_check_branch
      %245 = sbr.rel (0) target = $region49
    $region48: #{tpu_custom_call.1} parent=1 // pred_region
      %247 = vsyncadd [#allocation4], 0
      %s249 = sshll.u32 [#allocation10], 4
      %s250 = int_to_ptr.vmem [resolvable:$true] %s249
      %s251 = sshll.u32 %s7, 4
      %s252 = int_to_ptr.hbm [resolvable:$true] %s251
      %254 = dma.vmem_to_hbm [thread:$0]  %s250, 128, %s252, [#allocation4]
    $region49: #{tpu_custom_call.1} parent=1 // pred_fallthru
      _
    // Predicated region
    $region50: #{tpu_custom_call.1} parent=1 // pred_check
      _
    $region51: #{tpu_custom_call.1} parent=1 // pred_check_branch
      %256 = sbr.rel (0) target = $region53
    $region52: #{tpu_custom_call.1} parent=1 // pred_region
      %258 = dma.done [#allocation4], 128
    $region53: #{tpu_custom_call.1} parent=1 // pred_fallthru
      _
    %259 = vsyncpa [#allocation3], 1
    %260 = vsyncpa [#allocation6], 1
    %261 = vsyncpa [#allocation9], 1
    %262 = vsyncpa [#allocation4], 1

</llo_original>
